<compile_context>
chip_gen: v7x
topology: tpu7x:2x2x1
jax: 0.10.0
libtpu: 0.0.40
codegen_flags: <defaults>
</compile_context>

<pallas_src>
import math
import functools

import jax
import jax.numpy as jnp
from jax import lax
from jax.experimental import pallas as pl
from jax.experimental.pallas import tpu as pltpu


_VMEM_LIMIT = 48 * 1024 * 1024  # fits v7x (64 MiB physical) with headroom; > v5e scoped default


def _tile(dim, pref, align):
    """Largest tile <= pref that divides `dim` and is a multiple of `align`,
    falling back to the full dim (always a legal block)."""
    if dim <= pref:
        return dim
    t = (pref // align) * align
    while t >= align:
        if dim % t == 0:
            return t
        t -= align
    return dim


# ---------------------------------------------------------------------------
# Pallas kernel: tiled dense linear layer  y = x @ W_t + b   (W_t is (in, out))
# ---------------------------------------------------------------------------
def _linear_kernel(x_ref, w_ref, b_ref, o_ref, acc_ref):
    @pl.when(pl.program_id(2) == 0)
    def _init():
        acc_ref[...] = jnp.zeros_like(acc_ref)

    acc_ref[...] += jnp.dot(x_ref[...], w_ref[...],
                            preferred_element_type=jnp.float32)

    @pl.when(pl.program_id(2) == pl.num_programs(2) - 1)
    def _finalize():
        o_ref[...] = (acc_ref[...] + b_ref[...].astype(jnp.float32)).astype(o_ref.dtype)


def linear(x, w_t, b, *, tm_pref=256, tn_pref=256, tk_pref=512):
    """x: (M, D_in), w_t: (D_in, D_out) (pre-transposed), b: (D_out,)."""
    m, d_in = x.shape
    d_out = w_t.shape[1]
    tm = _tile(m, tm_pref, 8)
    tn = _tile(d_out, tn_pref, 128)
    tk = _tile(d_in, tk_pref, 128)
    grid = (m // tm, d_out // tn, d_in // tk)

    return pl.pallas_call(
        _linear_kernel,
        out_shape=jax.ShapeDtypeStruct((m, d_out), x.dtype),
        grid=grid,
        in_specs=[
            pl.BlockSpec((tm, tk), lambda i, j, k: (i, k)),
            pl.BlockSpec((tk, tn), lambda i, j, k: (k, j)),
            pl.BlockSpec((1, tn), lambda i, j, k: (0, j)),
        ],
        out_specs=pl.BlockSpec((tm, tn), lambda i, j, k: (i, j)),
        scratch_shapes=[pltpu.VMEM((tm, tn), jnp.float32)],
        compiler_params=pltpu.CompilerParams(
            dimension_semantics=("parallel", "parallel", "arbitrary"),
            vmem_limit_bytes=_VMEM_LIMIT),
    )(x, w_t, b.reshape(1, d_out))


# ---------------------------------------------------------------------------
# Pallas kernel: per-(batch, head, q-tile) scaled dot-product attention
# ---------------------------------------------------------------------------
def _attn_kernel(q_ref, k_ref, v_ref, ctx_ref, attn_ref=None, *, scale):
    # blocks (batch/head squeezed): q (tq, Dh), k/v (K, Dh)
    q = q_ref[...].astype(jnp.float32) * scale
    k = k_ref[...].astype(jnp.float32)
    # QK^T on the MXU without an explicit transpose: contract last axes of both.
    scores = lax.dot_general(q, k, (((1,), (1,)), ((), ())),
                             preferred_element_type=jnp.float32)      # (tq, K) f32
    m = jnp.max(scores, axis=-1, keepdims=True)
    e = jnp.exp(scores - m)
    s = jnp.sum(e, axis=-1, keepdims=True)
    attn = e * pl.reciprocal(s, approx=True)                          # EUP rcp + VPU mul
    if attn_ref is not None:
        attn_ref[...] = attn.astype(attn_ref.dtype)
    # TODO(synk): training-mode dropout on `attn` (pltpu.prng_*) not implemented (eval mode).
    ctx = jnp.dot(attn.astype(v_ref.dtype), v_ref[...],
                  preferred_element_type=jnp.float32)                 # (tq, Dh)
    ctx_ref[...] = ctx.astype(ctx_ref.dtype)


def attention_heads(q_arr, k_arr, v_arr, *, batch, heads, q_len, k_len, dh,
                    q_base=0, k_base=0, v_base=0, scale, out_dtype,
                    return_attn=True, tq_pref=256):
    """q_arr/k_arr/v_arr are (B, L, n_heads_total*Dh) projection buffers; the
    *_base arguments are head-block column offsets (0 for standalone buffers,
    nonzero when reading from a fused QKV buffer)."""
    sq = pl.Squeezed()
    tq = _tile(q_len, tq_pref, 8)
    grid = (batch, heads, q_len // tq)
    kernel = functools.partial(_attn_kernel, scale=scale)

    # TODO(synk): flash-style K tiling (online softmax) for very long sequences;
    # current version keeps the full K extent of one head in VMEM per grid step.
    fold_heads = (dh % 128 == 0)
    if fold_heads:
        # Head slicing expressed purely in the index_map (column offset h*Dh):
        # no transposes / reshapes through HBM.
        in_args = (q_arr, k_arr, v_arr)
        in_specs = [
            pl.BlockSpec((sq, tq, dh), lambda b, h, qi: (b, qi, q_base + h)),
            pl.BlockSpec((sq, k_len, dh), lambda b, h, qi: (b, 0, k_base + h)),
            pl.BlockSpec((sq, k_len, dh), lambda b, h, qi: (b, 0, v_base + h)),
        ]
        ctx_shape = jax.ShapeDtypeStruct((batch, q_len, heads * dh), out_dtype)
        ctx_spec = pl.BlockSpec((sq, tq, dh), lambda b, h, qi: (b, qi, h))
    else:
        # Fallback for non-lane-aligned dim_per_head: materialize (B, H, L, Dh)
        # with XLA transposes (extra HBM passes, but always-legal block shapes).
        def split_heads(x, base, length):
            x = lax.slice_in_dim(x, base * dh, (base + heads) * dh, axis=2)
            return x.reshape(batch, length, heads, dh).transpose(0, 2, 1, 3)
        in_args = (split_heads(q_arr, q_base, q_len),
                   split_heads(k_arr, k_base, k_len),
                   split_heads(v_arr, v_base, k_len))
        in_specs = [
            pl.BlockSpec((sq, sq, tq, dh), lambda b, h, qi: (b, h, qi, 0)),
            pl.BlockSpec((sq, sq, k_len, dh), lambda b, h, qi: (b, h, 0, 0)),
            pl.BlockSpec((sq, sq, k_len, dh), lambda b, h, qi: (b, h, 0, 0)),
        ]
        ctx_shape = jax.ShapeDtypeStruct((batch, heads, q_len, dh), out_dtype)
        ctx_spec = pl.BlockSpec((sq, sq, tq, dh), lambda b, h, qi: (b, h, qi, 0))

    out_shape = [ctx_shape]
    out_specs = [ctx_spec]
    if return_attn:
        out_shape.append(jax.ShapeDtypeStruct((batch, heads, q_len, k_len), out_dtype))
        out_specs.append(pl.BlockSpec((sq, sq, tq, k_len),
                                      lambda b, h, qi: (b, h, qi, 0)))

    outs = pl.pallas_call(
        kernel,
        out_shape=tuple(out_shape),
        grid=grid,
        in_specs=in_specs,
        out_specs=tuple(out_specs),
        compiler_params=pltpu.CompilerParams(
            dimension_semantics=("parallel", "parallel", "arbitrary"),
            vmem_limit_bytes=_VMEM_LIMIT),
    )(*in_args)

    ctx = outs[0]
    attn = outs[1] if return_attn else None
    if not fold_heads:
        ctx = ctx.transpose(0, 2, 1, 3).reshape(batch, q_len, heads * dh)
    return ctx, attn


# ---------------------------------------------------------------------------
# Module forward
# ---------------------------------------------------------------------------
def multi_headed_attention(key, value, query, params, head_count, mask=None,
                           return_attn=True):
    # TODO(synk): mask / layer_cache / max_relative_positions paths not implemented.
    assert mask is None
    batch, key_len, model_dim = key.shape
    query_len = query.shape[1]
    dh = model_dim // head_count
    scale = 1.0 / math.sqrt(dh)

    # One-time transpose of the PyTorch (out, in) weights to (in, out) so kernels
    # contract the native layout on the MXU (no in-kernel .T).
    wk_t, wv_t, wq_t, wf_t = (params["wk"].T, params["wv"].T,
                              params["wq"].T, params["wf"].T)

    if (key is query) and (value is query):
        # Self-attention: fused Q/K/V projection (single GEMM, x read once) and
        # the attention kernel reads heads straight out of the fused buffer.
        w_kvq = jnp.concatenate([wk_t, wv_t, wq_t], axis=1)          # (D, 3D)
        b_kvq = jnp.concatenate([params["bk"], params["bv"], params["bq"]])
        kvq = linear(query.reshape(batch * query_len, model_dim), w_kvq, b_kvq)
        kvq = kvq.reshape(batch, query_len, 3 * model_dim)
        q_arr = k_arr = v_arr = kvq
        k_base, v_base, q_base = 0, head_count, 2 * head_count
    else:
        k_arr = linear(key.reshape(batch * key_len, model_dim), wk_t,
                       params["bk"]).reshape(batch, key_len, model_dim)
        v_arr = linear(value.reshape(batch * key_len, model_dim), wv_t,
                       params["bv"]).reshape(batch, key_len, model_dim)
        q_arr = linear(query.reshape(batch * query_len, model_dim), wq_t,
                       params["bq"]).reshape(batch, query_len, model_dim)
        k_base = v_base = q_base = 0

    ctx, attn = attention_heads(
        q_arr, k_arr, v_arr, batch=batch, heads=head_count,
        q_len=query_len, k_len=key_len, dh=dh,
        q_base=q_base, k_base=k_base, v_base=v_base,
        scale=scale, out_dtype=query.dtype, return_attn=return_attn)

    output = linear(ctx.reshape(batch * query_len, model_dim), wf_t,
                    params["bf"]).reshape(batch, query_len, model_dim)
    return output, attn  # attn: (B, H, Q, K) or None


# ---------------------------------------------------------------------------
# Deterministic parameter init (PyTorch nn.Linear default: U(-1/sqrt(fan_in), ..))
# ---------------------------------------------------------------------------
def init_params(rng, model_dim):
    bound = 1.0 / math.sqrt(model_dim)
    keys = jax.random.split(rng, 8)
    def u(k, shape):
        return jax.random.uniform(k, shape, jnp.float32, -bound, bound)
    return {
        "wk": u(keys[0], (model_dim, model_dim)), "bk": u(keys[1], (model_dim,)),
        "wv": u(keys[2], (model_dim, model_dim)), "bv": u(keys[3], (model_dim,)),
        "wq": u(keys[4], (model_dim, model_dim)), "bq": u(keys[5], (model_dim,)),
        "wf": u(keys[6], (model_dim, model_dim)), "bf": u(keys[7], (model_dim,)),
    }


# ---------------------------------------------------------------------------
# Pure-JAX reference
# ---------------------------------------------------------------------------
def reference(key, value, query, params, head_count):
    B, key_len, model_dim = key.shape
    query_len = query.shape[1]
    dph = model_dim // head_count
    lin = lambda x, w, b: x @ w.T + b
    k = lin(key, params["wk"], params["bk"])
    v = lin(value, params["wv"], params["bv"])
    q = lin(query, params["wq"], params["bq"])
    sh = lambda x, L: x.reshape(B, L, head_count, dph).transpose(0, 2, 1, 3)
    kh, vh, qh = sh(k, key_len), sh(v, key_len), sh(q, query_len)
    qh = qh / math.sqrt(dph)
    scores = jnp.einsum("bhqd,bhkd->bhqk", qh, kh).astype(jnp.float32)
    attn = jax.nn.softmax(scores, axis=-1)
    ctx = jnp.einsum("bhqk,bhkd->bhqd", attn, vh)
    context = ctx.transpose(0, 2, 1, 3).reshape(B, query_len, model_dim)
    out = lin(context, params["wf"], params["bf"])
    return out, attn


if __name__ == "__main__":
    # dim_per_head = 128 -> lane-aligned head slicing (fast path, no transposes).
    batch, seq_len, model_dim, head_count = 2, 16, 512, 4

    root = jax.random.PRNGKey(0)
    k_params, k_k, k_v, k_q = jax.random.split(root, 4)
    params = init_params(k_params, model_dim)

    key = jax.random.normal(k_k, (batch, seq_len, model_dim), jnp.float32)
    value = jax.random.normal(k_v, (batch, seq_len, model_dim), jnp.float32)
    query = jax.random.normal(k_q, (batch, seq_len, model_dim), jnp.float32)

    # --- generic (cross-attention style, distinct K/V/Q) path ---
    out, attn = multi_headed_attention(key, value, query, params, head_count)
    out = jax.block_until_ready(out)
    attn = jax.block_until_ready(attn)
    ref_out, ref_attn = reference(key, value, query, params, head_count)
    assert out.shape == (batch, seq_len, model_dim)
    assert attn.shape == (batch, head_count, seq_len, seq_len)
    assert jnp.allclose(out, ref_out, atol=5e-3, rtol=5e-3)
    assert jnp.allclose(attn, ref_attn, atol=5e-3, rtol=5e-3)

    # --- self-attention (fused QKV projection) path ---
    out_s, attn_s = multi_headed_attention(query, query, query, params, head_count)
    out_s = jax.block_until_ready(out_s)
    attn_s = jax.block_until_ready(attn_s)
    ref_out_s, ref_attn_s = reference(query, query, query, params, head_count)
    assert jnp.allclose(out_s, ref_out_s, atol=5e-3, rtol=5e-3)
    assert jnp.allclose(attn_s, ref_attn_s, atol=5e-3, rtol=5e-3)

    print("KERNEL_OK")
</pallas_src>

<mosaic_0001>
module attributes {stable_mosaic.version = 11 : i64} {
  func.func @_linear_kernel(%arg0: i32, %arg1: i32, %arg2: i32, %arg3: memref<32x512xf32, #tpu.memory_space<vmem>>, %arg4: memref<512x256xf32, #tpu.memory_space<vmem>>, %arg5: memref<1x256xf32, #tpu.memory_space<vmem>>, %arg6: memref<32x256xf32, #tpu.memory_space<vmem>>, %arg7: memref<32x256xf32, #tpu.memory_space<vmem>>) attributes {dimension_semantics = [#tpu.dimension_semantics<parallel>, #tpu.dimension_semantics<parallel>, #tpu.dimension_semantics<arbitrary>], iteration_bounds = array<i64: 1, 2, 1>, scalar_prefetch = 0 : i64, scratch_operands = 1 : i64, tpu.core_type = #tpu.core_type<tc>, window_params = [{transform_indices = @transform_0, window_bounds = array<i64: 32, 512>}, {transform_indices = @transform_1, window_bounds = array<i64: 512, 256>}, {transform_indices = @transform_2, window_bounds = array<i64: 1, 256>}, {transform_indices = @transform_3, window_bounds = array<i64: 32, 256>}]} {
    %c0_i32 = arith.constant 0 : i32
    %0 = arith.cmpi eq, %arg2, %c0_i32 : i32
    %1 = arith.extui %0 : i1 to i32
    %c0_i32_0 = arith.constant 0 : i32
    %2 = arith.cmpi ne, %1, %c0_i32_0 : i32
    scf.if %2 {
      %cst_10 = arith.constant 0.000000e+00 : f32
      %12 = vector.broadcast %cst_10 : f32 to vector<32x256xf32>
      %c0_11 = arith.constant 0 : index
      %c0_12 = arith.constant 0 : index
      %13 = vector.load %arg7[%c0_11, %c0_12] : memref<32x256xf32, #tpu.memory_space<vmem>>, vector<32x256xf32>
      tpu.vector_store %arg7[%c0_11, %c0_12], %12 {strides = array<i32>} : memref<32x256xf32, #tpu.memory_space<vmem>>, vector<32x256xf32>,
    } else {
    }
    %c0 = arith.constant 0 : index
    %c0_1 = arith.constant 0 : index
    %3 = vector.load %arg7[%c0, %c0_1] : memref<32x256xf32, #tpu.memory_space<vmem>>, vector<32x256xf32>
    %c0_2 = arith.constant 0 : index
    %c0_3 = arith.constant 0 : index
    %4 = vector.load %arg3[%c0_2, %c0_3] : memref<32x512xf32, #tpu.memory_space<vmem>>, vector<32x512xf32>
    %c0_4 = arith.constant 0 : index
    %c0_5 = arith.constant 0 : index
    %5 = vector.load %arg4[%c0_4, %c0_5] : memref<512x256xf32, #tpu.memory_space<vmem>>, vector<512x256xf32>
    %cst = arith.constant dense<0.000000e+00> : vector<32x256xf32>
    %6 = tpu.matmul %4, %5, %cst {dimension_numbers = #tpu.dot_dimension_numbers<[1], [0], [0], [1], [0, 0, 1, 1], [], []>} : vector<32x512xf32>, vector<512x256xf32>, vector<32x256xf32> -> vector<32x256xf32>
    %7 = arith.addf %3, %6 : vector<32x256xf32>
    %c0_6 = arith.constant 0 : index
    %c0_7 = arith.constant 0 : index
    %8 = vector.load %arg7[%c0_6, %c0_7] : memref<32x256xf32, #tpu.memory_space<vmem>>, vector<32x256xf32>
    tpu.vector_store %arg7[%c0_6, %c0_7], %7 {strides = array<i32>} : memref<32x256xf32, #tpu.memory_space<vmem>>, vector<32x256xf32>,
    %c0_i32_8 = arith.constant 0 : i32
    %9 = arith.cmpi eq, %arg2, %c0_i32_8 : i32
    %10 = arith.extui %9 : i1 to i32
    %c0_i32_9 = arith.constant 0 : i32
    %11 = arith.cmpi ne, %10, %c0_i32_9 : i32
    scf.if %11 {
      %c0_10 = arith.constant 0 : index
      %c0_11 = arith.constant 0 : index
      %12 = vector.load %arg7[%c0_10, %c0_11] : memref<32x256xf32, #tpu.memory_space<vmem>>, vector<32x256xf32>
      %c0_12 = arith.constant 0 : index
      %c0_13 = arith.constant 0 : index
      %13 = vector.load %arg5[%c0_12, %c0_13] : memref<1x256xf32, #tpu.memory_space<vmem>>, vector<1x256xf32>
      %14 = vector.broadcast %13 : vector<1x256xf32> to vector<32x256xf32>
      %15 = arith.addf %12, %14 : vector<32x256xf32>
      %c0_14 = arith.constant 0 : index
      %c0_15 = arith.constant 0 : index
      %16 = vector.load %arg6[%c0_14, %c0_15] : memref<32x256xf32, #tpu.memory_space<vmem>>, vector<32x256xf32>
      tpu.vector_store %arg6[%c0_14, %c0_15], %15 {strides = array<i32>} : memref<32x256xf32, #tpu.memory_space<vmem>>, vector<32x256xf32>,
    } else {
    }
    return
  }
  func.func @transform_0(%arg0: i32, %arg1: i32, %arg2: i32) -> (i32, i32) {
    %c0_i32 = arith.constant 0 : i32
    return %arg0, %arg2 : i32, i32
  }
  func.func @transform_1(%arg0: i32, %arg1: i32, %arg2: i32) -> (i32, i32) {
    %c0_i32 = arith.constant 0 : i32
    return %arg2, %arg1 : i32, i32
  }
  func.func @transform_2(%arg0: i32, %arg1: i32, %arg2: i32) -> (i32, i32) {
    %c0_i32 = arith.constant 0 : i32
    %c0_i32_0 = arith.constant 0 : i32
    return %c0_i32, %arg1 : i32, i32
  }
  func.func @transform_3(%arg0: i32, %arg1: i32, %arg2: i32) -> (i32, i32) {
    %c0_i32 = arith.constant 0 : i32
    return %arg0, %arg1 : i32, i32
  }
}

</mosaic_0001>

<llo_original>
// kernel: tpu_custom_call.1
$region0: #{tpu_custom_call.1}
  #allocation0 [shape = 'u32[]', space=smem, size = 0x4, offset = 0x4, fixed_abs, tag = 'smem constant byte address 0x4 - core index']
  #allocation1 [shape = 'u32[144,128]{1,0:T(1,128)}', space=vmem, size = 0x12000, scoped, tag = 'internal scratch']
  #allocation2 [shape = 'f32[32,256]{1,0:T(8,128)}', space=vmem, size = 0x8000, scoped, tag = 'scratch operand']
  %s0 = inlined_call_operand.hbm [shape: f32[32,512], index: 0, kind: input, shape index: {}]
  %s1 = inlined_call_operand.hbm [shape: f32[512,512], index: 1, kind: input, shape index: {}]
  %s2 = inlined_call_operand.vmem [shape: f32[1,512], index: 2, kind: input, shape index: {}]
  %s3 = inlined_call_operand.hbm [shape: f32[32,512], index: 3, kind: output, shape index: {}]
  %s4 = sld [smem:[#allocation0]]
  $region61: #{tpu_custom_call.1} parent=0
    _
  %s6 = ssub.s32 1, %s4
  %s7 = scalar_select 0, %s6, %s4
  $region1: #{tpu_custom_call.1} parent=0
    #allocation3 [shape = 'u8[65536]{0}', space=vmem, size = 0x10000, scoped, tag = 'input window, operand 0, single buffered']
    #allocation4 [shape = 's32[2]{0}', space=sflag, size = 0x8, scoped, tag = 'scoped memory for tpu_custom_call.1']
    #allocation5 [shape = 's32[2]{0}', space=sflag, size = 0x8, scoped, tag = 'scoped memory for tpu_custom_call.1']
    #allocation6 [shape = 'u8[1048576]{0}', space=vmem, size = 0x100000, scoped, tag = 'input window, operand 1']
    #allocation7 [shape = 's32[2]{0}', space=sflag, size = 0x8, scoped, tag = 'scoped memory for tpu_custom_call.1']
    #allocation8 [shape = 'u8[65536]{0}', space=vmem, size = 0x10000, scoped, tag = 'output window, operand 0']
    %8 = vsyncpa [#allocation4], 0
    %9 = vsyncpa [#allocation7], 0
    %s10 = scalar_lea.sflag [#allocation7], 1
    %11 = vsyncpa %s10, 0
    %12 = vsyncpa [#allocation5], 0
    %s13 = scalar_lea.sflag [#allocation5], 1
    %14 = vsyncpa %s13, 0
    loop: start=0, step=1, limit=4
    $region2: #{tpu_custom_call.1} parent=1 // loop_pre_header
      _
    $region3: #{tpu_custom_call.1} parent=1 // loop_header
      %s16 = sphi 0, %s20
      %p17 = scmp.ge.s32.totalorder %s16, 4
      %s23 = sphi 0, %s42
      %s24 = sphi 0, %s38
      %s25 = sphi 0, %s34
      %s26 = sphi 0, %s23
      %s27 = sphi 0, %s24
      %s28 = sphi 0, %s25
      %s29 = sphi 0, %s26
      %s30 = sphi 0, %s27
      %s31 = sphi 0, %s28
      %s47 = sphi 0, %s49
      %s50 = sphi 0, %s47
      %s51 = sphi 0, %s50
      %s67 = sphi 0, %s51
      %s75 = sphi 0, %s77
      %s78 = sphi 0, %s75
      %s79 = sphi 0, %s78
      %s95 = sphi 0, %s79
      %s101 = sphi 0, %s103
      %s104 = sphi 0, %s101
      %s105 = sphi 0, %s104
      %s121 = sphi 0, %s105
      %s129 = sphi 0, %s131
      %s132 = sphi 0, %s129
      %s133 = sphi 0, %s132
      %s149 = sphi 0, %s133
    $region4: #{tpu_custom_call.1} parent=1 // loop_header_branch
      %19 = sbr.rel (%p17) target = $region8
    $region5: #{tpu_custom_call.1} parent=1 // loop_body
      %s21 = ssub.s32 %s16, 1
      %s22 = ssub.s32 %s16, 2
      %s32 = sadd.s32 1, %s25
      %p33 = scmp.ge.s32.totalorder %s32, 1
      %s34 = scalar_select %p33, 0, %s32
      %s35 = sadd.s32 1, %s24
      %s36 = scalar_select %p33, %s35, %s24
      %p37 = scmp.ge.s32.totalorder %s36, 2
      %s38 = scalar_select %p37, 0, %s36
      %s39 = sadd.s32 1, %s23
      %s40 = scalar_select %p37, %s39, %s23
      %p41 = scmp.ge.s32.totalorder %s40, 1
      %s42 = scalar_select %p41, 0, %s40
      %s43 = ssub.s32 %s23, %s42
      %s44 = ssub.s32 %s25, %s34
      %s45 = sor.u32 %s43, %s44
      %p46 = scmp.eq.s32.totalorder %s45, 0
      %s48 = sadd.s32 %s47, 1
      %s49 = scalar_select %p46, %s47, %s48
      %p52 = pneg %p46
      %p53 = scmp.eq.s32.totalorder %s16, 1
      %p54 = por %p52, %p53
      %p55 = scmp.ne.s32.totalorder %s47, %s50
      %p56 = scmp.eq.s32.totalorder %s16, 0
      %p57 = por %p55, %p56
      %p58 = scmp.ne.s32.totalorder %s47, %s50
      %p59 = scmp.eq.s32.totalorder %s21, 1
      %p60 = por %p58, %p59
      %p61 = scmp.ne.s32.totalorder %s50, %s51
      %p62 = scmp.eq.s32.totalorder %s21, 0
      %p63 = por %p61, %p62
      %p64 = scmp.ne.s32.totalorder %s50, %s51
      %p65 = scmp.eq.s32.totalorder %s22, 1
      %p66 = por %p64, %p65
      %p68 = scmp.ne.s32.totalorder %s51, %s67
      %p69 = scmp.eq.s32.totalorder %s22, 0
      %p70 = por %p68, %p69
      %s71 = ssub.s32 %s25, %s34
      %s72 = ssub.s32 %s24, %s38
      %s73 = sor.u32 %s71, %s72
      %p74 = scmp.eq.s32.totalorder %s73, 0
      %s76 = sadd.s32 %s75, 1
      %s77 = scalar_select %p74, %s75, %s76
      %p80 = pneg %p74
      %p81 = scmp.eq.s32.totalorder %s16, 1
      %p82 = por %p80, %p81
      %p83 = scmp.ne.s32.totalorder %s75, %s78
      %p84 = scmp.eq.s32.totalorder %s16, 0
      %p85 = por %p83, %p84
      %p86 = scmp.ne.s32.totalorder %s75, %s78
      %p87 = scmp.eq.s32.totalorder %s21, 1
      %p88 = por %p86, %p87
      %p89 = scmp.ne.s32.totalorder %s78, %s79
      %p90 = scmp.eq.s32.totalorder %s21, 0
      %p91 = por %p89, %p90
      %p92 = scmp.ne.s32.totalorder %s78, %s79
      %p93 = scmp.eq.s32.totalorder %s22, 1
      %p94 = por %p92, %p93
      %p96 = scmp.ne.s32.totalorder %s79, %s95
      %p97 = scmp.eq.s32.totalorder %s22, 0
      %p98 = por %p96, %p97
      %s99 = ssub.s32 %s24, %s38
      %p100 = scmp.eq.s32.totalorder %s99, 0
      %s102 = sadd.s32 %s101, 1
      %s103 = scalar_select %p100, %s101, %s102
      %p106 = pneg %p100
      %p107 = scmp.eq.s32.totalorder %s16, 1
      %p108 = por %p106, %p107
      %p109 = scmp.ne.s32.totalorder %s101, %s104
      %p110 = scmp.eq.s32.totalorder %s16, 0
      %p111 = por %p109, %p110
      %p112 = scmp.ne.s32.totalorder %s101, %s104
      %p113 = scmp.eq.s32.totalorder %s21, 1
      %p114 = por %p112, %p113
      %p115 = scmp.ne.s32.totalorder %s104, %s105
      %p116 = scmp.eq.s32.totalorder %s21, 0
      %p117 = por %p115, %p116
      %p118 = scmp.ne.s32.totalorder %s104, %s105
      %p119 = scmp.eq.s32.totalorder %s22, 1
      %p120 = por %p118, %p119
      %p122 = scmp.ne.s32.totalorder %s105, %s121
      %p123 = scmp.eq.s32.totalorder %s22, 0
      %p124 = por %p122, %p123
      %s125 = ssub.s32 %s23, %s42
      %s126 = ssub.s32 %s24, %s38
      %s127 = sor.u32 %s125, %s126
      %p128 = scmp.eq.s32.totalorder %s127, 0
      %s130 = sadd.s32 %s129, 1
      %s131 = scalar_select %p128, %s129, %s130
      %p134 = pneg %p128
      %p135 = scmp.eq.s32.totalorder %s16, 1
      %p136 = por %p134, %p135
      %p137 = scmp.ne.s32.totalorder %s129, %s132
      %p138 = scmp.eq.s32.totalorder %s16, 0
      %p139 = por %p137, %p138
      %p140 = scmp.ne.s32.totalorder %s129, %s132
      %p141 = scmp.eq.s32.totalorder %s21, 1
      %p142 = por %p140, %p141
      %p143 = scmp.ne.s32.totalorder %s132, %s133
      %p144 = scmp.eq.s32.totalorder %s21, 0
      %p145 = por %p143, %p144
      %p146 = scmp.ne.s32.totalorder %s132, %s133
      %p147 = scmp.eq.s32.totalorder %s22, 1
      %p148 = por %p146, %p147
      %p150 = scmp.ne.s32.totalorder %s133, %s149
      %p151 = scmp.eq.s32.totalorder %s22, 0
      %p152 = por %p150, %p151
      %p153 = scmp.le.s32.totalorder 1, %s16
      %p154 = scmp.lt.s32.totalorder %s16, 3
      %p155 = pnand %p153, %p154
      %p156 = pneg %p155
      // Predicated region
      $region9: #{tpu_custom_call.1} parent=5 // pred_check
        _
      $region10: #{tpu_custom_call.1} parent=5 // pred_check_branch
        %158 = sbr.rel (%p155) target = $region12
      $region11: #{tpu_custom_call.1} parent=5 // pred_region
        %s159 = ssub.s32 %s16, 1
        // Predicated region
        $region13: #{tpu_custom_call.1} parent=11 // pred_check
          %p160 = pneg %p63
        $region14: #{tpu_custom_call.1} parent=11 // pred_check_branch
          %162 = sbr.rel (%p160) target = $region16
        $region15: #{tpu_custom_call.1} parent=11 // pred_region
          %s163 = smul.u32 4, %s26
          %s164 = smul.u32 4, %s28
          %s166 = ssub.s32 2048, 2048
          %167 = vsyncadd [#allocation4], %s166
          %s168 = smul.addr %s163, 4
          %s169 = sadd.s32 %s164, %s168
          %s170 = smul.addr %s169, 128
          %s171 = scalar_lea.hbm %s0, %s170
          %s172 = sshll.u32 [#allocation3], 4
          %s173 = int_to_ptr.vmem [resolvable:$true] %s172
          %178 = dma.hbm_to_vmem [thread:$0]  %s171, 2048, %s173, [#allocation4], 512, 512, 32
        $region16: #{tpu_custom_call.1} parent=11 // pred_fallthru
          _
      $region12: #{tpu_custom_call.1} parent=5 // pred_fallthru
        _
      %p179 = scmp.lt.s32.totalorder %s16, 2
      // Predicated region
      $region17: #{tpu_custom_call.1} parent=5 // pred_check
        %p180 = pneg %p179
      $region18: #{tpu_custom_call.1} parent=5 // pred_check_branch
        %182 = sbr.rel (%p180) target = $region20
      $region19: #{tpu_custom_call.1} parent=5 // pred_region
        // Predicated region
        $region21: #{tpu_custom_call.1} parent=19 // pred_check
          %p183 = pneg %p85
        $region22: #{tpu_custom_call.1} parent=19 // pred_check_branch
          %185 = sbr.rel (%p183) target = $region24
        $region23: #{tpu_custom_call.1} parent=19 // pred_region
          %s186 = sand.u32 %s75, 1
          %s187 = scalar_lea.sflag [#allocation7], %s186
          %s188 = sand.u32 %s75, 1
          %s189 = smul.addr %s188, 1024
          %s190 = scalar_lea.vmem [#allocation6], %s189
          %s191 = smul.u32 64, %s25
          %s192 = smul.u32 2, %s24
          %s194 = ssub.s32 16384, 16384
          %195 = vsyncadd %s187, %s194
          %s196 = smul.addr %s191, 4
          %s197 = sadd.s32 %s192, %s196
          %s198 = smul.addr %s197, 128
          %s199 = scalar_lea.hbm %s1, %s198
          %s200 = sshll.u32 %s190, 4
          %s201 = int_to_ptr.vmem [resolvable:$true] %s200
          %206 = dma.hbm_to_vmem [thread:$0]  %s199, 16384, %s201, %s187, 512, 256, 16
        $region24: #{tpu_custom_call.1} parent=19 // pred_fallthru
          _
        // Predicated region
        $region25: #{tpu_custom_call.1} parent=19 // pred_check
          %p207 = pneg %p111
        $region26: #{tpu_custom_call.1} parent=19 // pred_check_branch
          %209 = sbr.rel (%p207) target = $region28
        $region27: #{tpu_custom_call.1} parent=19 // pred_region
          %s210 = smul.u32 2, %s24
          %p211 = scmp.lt.s32.totalorder %s210, 3
          %s212 = scalar_select %p211, %s210, 3
          %s213 = scalar_lea.vmem %s2, %s212
          %s214 = smul.u32 2, %s24
        $region28: #{tpu_custom_call.1} parent=19 // pred_fallthru
          _
      $region20: #{tpu_custom_call.1} parent=5 // pred_fallthru
        _
      %p215 = scmp.le.s32.totalorder 1, %s16
      %p216 = scmp.lt.s32.totalorder %s16, 3
      %p217 = pnand %p215, %p216
      %p218 = pneg %p217
      // Predicated region
      $region29: #{tpu_custom_call.1} parent=5 // pred_check
        _
      $region30: #{tpu_custom_call.1} parent=5 // pred_check_branch
        %220 = sbr.rel (%p217) target = $region32
      $region31: #{tpu_custom_call.1} parent=5 // pred_region
        %s221 = ssub.s32 %s16, 1
        // Predicated region
        $region33: #{tpu_custom_call.1} parent=31 // pred_check
          %p222 = pneg %p63
        $region34: #{tpu_custom_call.1} parent=31 // pred_check_branch
          %224 = sbr.rel (%p222) target = $region36
        $region35: #{tpu_custom_call.1} parent=31 // pred_region
          %225 = dma.done [#allocation4], 2048
        $region36: #{tpu_custom_call.1} parent=31 // pred_fallthru
          _
        %s226 = sand.u32 %s78, 1
        %s227 = scalar_lea.sflag [#allocation7], %s226
        %s228 = sand.u32 %s78, 1
        %s229 = smul.addr %s228, 1024
        %s230 = scalar_lea.vmem [#allocation6], %s229
        // Predicated region
        $region37: #{tpu_custom_call.1} parent=31 // pred_check
          %p231 = pneg %p91
        $region38: #{tpu_custom_call.1} parent=31 // pred_check_branch
          %233 = sbr.rel (%p231) target = $region40
        $region39: #{tpu_custom_call.1} parent=31 // pred_region
          %234 = dma.done %s227, 16384
        $region40: #{tpu_custom_call.1} parent=31 // pred_fallthru
          _
        %p235 = pneg %p63
        %p236 = pneg %p60
        %s237 = sand.u32 %s78, 1
        %s238 = scalar_lea.sflag [#allocation7], %s237
        %s239 = sand.u32 %s78, 1
        %s240 = smul.addr %s239, 1024
        %s241 = scalar_lea.vmem [#allocation6], %s240
        %p242 = pneg %p91
        %p243 = pneg %p88
        %s244 = smul.u32 2, %s27
        %p245 = scmp.lt.s32.totalorder %s244, 3
        %s246 = scalar_select %p245, %s244, 3
        %s247 = scalar_lea.vmem %s2, %s246
        %p248 = pneg %p117
        %p249 = pneg %p114
        %p250 = pneg %p145
        %p251 = pneg %p142
        %s252 = sand.u32 %s132, 1
        %s253 = scalar_lea.sflag [#allocation5], %s252
        %s254 = sand.u32 %s132, 1
        %s255 = smul.addr %s254, 64
        %s256 = scalar_lea.vmem [#allocation8], %s255
        %s257 = smul.u32 4, %s26
        %s258 = smul.u32 4, %s28
        %s259 = smul.u32 64, %s28
        %s260 = smul.u32 2, %s27
        %s261 = smul.u32 2, %s27
        %p262 = scmp.lt.s32.totalorder %s261, 3
        %s263 = scalar_select %p262, %s261, 3
        %s264 = scalar_lea.vmem %s2, %s263
        %s265 = smul.u32 2, %s27
        %s266 = smul.u32 4, %s26
        %s267 = smul.u32 2, %s27
        %p268 = scmp.eq.s32.totalorder %s28, 0
        // Predicated region
        $region41: #{tpu_custom_call.1} parent=31 // pred_check
          %p269 = pneg %p268
        $region42: #{tpu_custom_call.1} parent=31 // pred_check_branch
          %271 = sbr.rel (%p269) target = $region44
        $region43: #{tpu_custom_call.1} parent=31 // pred_region
          %272 = vst [vmem:[#allocation2] sm:$0xff] 0.0
          %273 = vst [vmem:[#allocation2 + $0x8] sm:$0xff] 0.0
          %274 = vst [vmem:[#allocation2 + $0x10] sm:$0xff] 0.0
          %275 = vst [vmem:[#allocation2 + $0x18] sm:$0xff] 0.0
          %276 = vst [vmem:[#allocation2 + $0x20] sm:$0xff] 0.0
          %277 = vst [vmem:[#allocation2 + $0x28] sm:$0xff] 0.0
          %278 = vst [vmem:[#allocation2 + $0x30] sm:$0xff] 0.0
          %279 = vst [vmem:[#allocation2 + $0x38] sm:$0xff] 0.0
        $region44: #{tpu_custom_call.1} parent=31 // pred_fallthru
          _
        %v280 = vld [vmem:[#allocation2] sm:$0xff]
        %v281 = vld [vmem:[#allocation2 + $0x8] sm:$0xff]
        %v282 = vld [vmem:[#allocation2 + $0x10] sm:$0xff]
        %v283 = vld [vmem:[#allocation2 + $0x18] sm:$0xff]
        %v284 = vld [vmem:[#allocation2 + $0x20] sm:$0xff]
        %v285 = vld [vmem:[#allocation2 + $0x28] sm:$0xff]
        %v286 = vld [vmem:[#allocation2 + $0x30] sm:$0xff]
        %v287 = vld [vmem:[#allocation2 + $0x38] sm:$0xff]
        %v288 = vld [vmem:[#allocation3] sm:$0xff]
        %v289 = vld [vmem:[#allocation3 + $0x8] sm:$0xff]
        %v290 = vld [vmem:[#allocation3 + $0x10] sm:$0xff]
        %v291 = vld [vmem:[#allocation3 + $0x18] sm:$0xff]
        %v292 = vld [vmem:[#allocation3 + $0x20] sm:$0xff]
        %v293 = vld [vmem:[#allocation3 + $0x28] sm:$0xff]
        %v294 = vld [vmem:[#allocation3 + $0x30] sm:$0xff]
        %v295 = vld [vmem:[#allocation3 + $0x38] sm:$0xff]
        %v296 = vld [vmem:[#allocation3 + $0x40] sm:$0xff]
        %v297 = vld [vmem:[#allocation3 + $0x48] sm:$0xff]
        %v298 = vld [vmem:[#allocation3 + $0x50] sm:$0xff]
        %v299 = vld [vmem:[#allocation3 + $0x58] sm:$0xff]
        %v300 = vld [vmem:[#allocation3 + $0x60] sm:$0xff]
        %v301 = vld [vmem:[#allocation3 + $0x68] sm:$0xff]
        %v302 = vld [vmem:[#allocation3 + $0x70] sm:$0xff]
        %v303 = vld [vmem:[#allocation3 + $0x78] sm:$0xff]
        %v304 = vld [vmem:[%s230] sm:$0xff]
        %v305 = vld [vmem:[%s230 + $0x8] sm:$0xff]
        %v306 = vld [vmem:[%s230 + $0x10] sm:$0xff]
        %v307 = vld [vmem:[%s230 + $0x18] sm:$0xff]
        %v308 = vld [vmem:[%s230 + $0x20] sm:$0xff]
        %v309 = vld [vmem:[%s230 + $0x28] sm:$0xff]
        %v310 = vld [vmem:[%s230 + $0x30] sm:$0xff]
        %v311 = vld [vmem:[%s230 + $0x38] sm:$0xff]
        %v312 = vld [vmem:[%s230 + $0x40] sm:$0xff]
        %v313 = vld [vmem:[%s230 + $0x48] sm:$0xff]
        %v314 = vld [vmem:[%s230 + $0x50] sm:$0xff]
        %v315 = vld [vmem:[%s230 + $0x58] sm:$0xff]
        %v316 = vld [vmem:[%s230 + $0x60] sm:$0xff]
        %v317 = vld [vmem:[%s230 + $0x68] sm:$0xff]
        %v318 = vld [vmem:[%s230 + $0x70] sm:$0xff]
        %v319 = vld [vmem:[%s230 + $0x78] sm:$0xff]
        %v320 = vld [vmem:[%s230 + $0x80] sm:$0xff]
        %v321 = vld [vmem:[%s230 + $0x88] sm:$0xff]
        %v322 = vld [vmem:[%s230 + $0x90] sm:$0xff]
        %v323 = vld [vmem:[%s230 + $0x98] sm:$0xff]
        %v324 = vld [vmem:[%s230 + $0xa0] sm:$0xff]
        %v325 = vld [vmem:[%s230 + $0xa8] sm:$0xff]
        %v326 = vld [vmem:[%s230 + $0xb0] sm:$0xff]
        %v327 = vld [vmem:[%s230 + $0xb8] sm:$0xff]
        %v328 = vld [vmem:[%s230 + $0xc0] sm:$0xff]
        %v329 = vld [vmem:[%s230 + $0xc8] sm:$0xff]
        %v330 = vld [vmem:[%s230 + $0xd0] sm:$0xff]
        %v331 = vld [vmem:[%s230 + $0xd8] sm:$0xff]
        %v332 = vld [vmem:[%s230 + $0xe0] sm:$0xff]
        %v333 = vld [vmem:[%s230 + $0xe8] sm:$0xff]
        %v334 = vld [vmem:[%s230 + $0xf0] sm:$0xff]
        %v335 = vld [vmem:[%s230 + $0xf8] sm:$0xff]
        %v336 = vld [vmem:[%s230 + $0x100] sm:$0xff]
        %v337 = vld [vmem:[%s230 + $0x108] sm:$0xff]
        %v338 = vld [vmem:[%s230 + $0x110] sm:$0xff]
        %v339 = vld [vmem:[%s230 + $0x118] sm:$0xff]
        %v340 = vld [vmem:[%s230 + $0x120] sm:$0xff]
        %v341 = vld [vmem:[%s230 + $0x128] sm:$0xff]
        %v342 = vld [vmem:[%s230 + $0x130] sm:$0xff]
        %v343 = vld [vmem:[%s230 + $0x138] sm:$0xff]
        %v344 = vld [vmem:[%s230 + $0x140] sm:$0xff]
        %v345 = vld [vmem:[%s230 + $0x148] sm:$0xff]
        %v346 = vld [vmem:[%s230 + $0x150] sm:$0xff]
        %v347 = vld [vmem:[%s230 + $0x158] sm:$0xff]
        %v348 = vld [vmem:[%s230 + $0x160] sm:$0xff]
        %v349 = vld [vmem:[%s230 + $0x168] sm:$0xff]
        %v350 = vld [vmem:[%s230 + $0x170] sm:$0xff]
        %v351 = vld [vmem:[%s230 + $0x178] sm:$0xff]
        %v352 = vld [vmem:[%s230 + $0x180] sm:$0xff]
        %v353 = vld [vmem:[%s230 + $0x188] sm:$0xff]
        %v354 = vld [vmem:[%s230 + $0x190] sm:$0xff]
        %v355 = vld [vmem:[%s230 + $0x198] sm:$0xff]
        %v356 = vld [vmem:[%s230 + $0x1a0] sm:$0xff]
        %v357 = vld [vmem:[%s230 + $0x1a8] sm:$0xff]
        %v358 = vld [vmem:[%s230 + $0x1b0] sm:$0xff]
        %v359 = vld [vmem:[%s230 + $0x1b8] sm:$0xff]
        %v360 = vld [vmem:[%s230 + $0x1c0] sm:$0xff]
        %v361 = vld [vmem:[%s230 + $0x1c8] sm:$0xff]
        %v362 = vld [vmem:[%s230 + $0x1d0] sm:$0xff]
        %v363 = vld [vmem:[%s230 + $0x1d8] sm:$0xff]
        %v364 = vld [vmem:[%s230 + $0x1e0] sm:$0xff]
        %v365 = vld [vmem:[%s230 + $0x1e8] sm:$0xff]
        %v366 = vld [vmem:[%s230 + $0x1f0] sm:$0xff]
        %v367 = vld [vmem:[%s230 + $0x1f8] sm:$0xff]
        %v368 = vld [vmem:[%s230 + $0x200] sm:$0xff]
        %v369 = vld [vmem:[%s230 + $0x208] sm:$0xff]
        %v370 = vld [vmem:[%s230 + $0x210] sm:$0xff]
        %v371 = vld [vmem:[%s230 + $0x218] sm:$0xff]
        %v372 = vld [vmem:[%s230 + $0x220] sm:$0xff]
        %v373 = vld [vmem:[%s230 + $0x228] sm:$0xff]
        %v374 = vld [vmem:[%s230 + $0x230] sm:$0xff]
        %v375 = vld [vmem:[%s230 + $0x238] sm:$0xff]
        %v376 = vld [vmem:[%s230 + $0x240] sm:$0xff]
        %v377 = vld [vmem:[%s230 + $0x248] sm:$0xff]
        %v378 = vld [vmem:[%s230 + $0x250] sm:$0xff]
        %v379 = vld [vmem:[%s230 + $0x258] sm:$0xff]
        %v380 = vld [vmem:[%s230 + $0x260] sm:$0xff]
        %v381 = vld [vmem:[%s230 + $0x268] sm:$0xff]
        %v382 = vld [vmem:[%s230 + $0x270] sm:$0xff]
        %v383 = vld [vmem:[%s230 + $0x278] sm:$0xff]
        %v384 = vld [vmem:[%s230 + $0x280] sm:$0xff]
        %v385 = vld [vmem:[%s230 + $0x288] sm:$0xff]
        %v386 = vld [vmem:[%s230 + $0x290] sm:$0xff]
        %v387 = vld [vmem:[%s230 + $0x298] sm:$0xff]
        %v388 = vld [vmem:[%s230 + $0x2a0] sm:$0xff]
        %v389 = vld [vmem:[%s230 + $0x2a8] sm:$0xff]
        %v390 = vld [vmem:[%s230 + $0x2b0] sm:$0xff]
        %v391 = vld [vmem:[%s230 + $0x2b8] sm:$0xff]
        %v392 = vld [vmem:[%s230 + $0x2c0] sm:$0xff]
        %v393 = vld [vmem:[%s230 + $0x2c8] sm:$0xff]
        %v394 = vld [vmem:[%s230 + $0x2d0] sm:$0xff]
        %v395 = vld [vmem:[%s230 + $0x2d8] sm:$0xff]
        %v396 = vld [vmem:[%s230 + $0x2e0] sm:$0xff]
        %v397 = vld [vmem:[%s230 + $0x2e8] sm:$0xff]
        %v398 = vld [vmem:[%s230 + $0x2f0] sm:$0xff]
        %v399 = vld [vmem:[%s230 + $0x2f8] sm:$0xff]
        %v400 = vld [vmem:[%s230 + $0x300] sm:$0xff]
        %v401 = vld [vmem:[%s230 + $0x308] sm:$0xff]
        %v402 = vld [vmem:[%s230 + $0x310] sm:$0xff]
        %v403 = vld [vmem:[%s230 + $0x318] sm:$0xff]
        %v404 = vld [vmem:[%s230 + $0x320] sm:$0xff]
        %v405 = vld [vmem:[%s230 + $0x328] sm:$0xff]
        %v406 = vld [vmem:[%s230 + $0x330] sm:$0xff]
        %v407 = vld [vmem:[%s230 + $0x338] sm:$0xff]
        %v408 = vld [vmem:[%s230 + $0x340] sm:$0xff]
        %v409 = vld [vmem:[%s230 + $0x348] sm:$0xff]
        %v410 = vld [vmem:[%s230 + $0x350] sm:$0xff]
        %v411 = vld [vmem:[%s230 + $0x358] sm:$0xff]
        %v412 = vld [vmem:[%s230 + $0x360] sm:$0xff]
        %v413 = vld [vmem:[%s230 + $0x368] sm:$0xff]
        %v414 = vld [vmem:[%s230 + $0x370] sm:$0xff]
        %v415 = vld [vmem:[%s230 + $0x378] sm:$0xff]
        %v416 = vld [vmem:[%s230 + $0x380] sm:$0xff]
        %v417 = vld [vmem:[%s230 + $0x388] sm:$0xff]
        %v418 = vld [vmem:[%s230 + $0x390] sm:$0xff]
        %v419 = vld [vmem:[%s230 + $0x398] sm:$0xff]
        %v420 = vld [vmem:[%s230 + $0x3a0] sm:$0xff]
        %v421 = vld [vmem:[%s230 + $0x3a8] sm:$0xff]
        %v422 = vld [vmem:[%s230 + $0x3b0] sm:$0xff]
        %v423 = vld [vmem:[%s230 + $0x3b8] sm:$0xff]
        %v424 = vld [vmem:[%s230 + $0x3c0] sm:$0xff]
        %v425 = vld [vmem:[%s230 + $0x3c8] sm:$0xff]
        %v426 = vld [vmem:[%s230 + $0x3d0] sm:$0xff]
        %v427 = vld [vmem:[%s230 + $0x3d8] sm:$0xff]
        %v428 = vld [vmem:[%s230 + $0x3e0] sm:$0xff]
        %v429 = vld [vmem:[%s230 + $0x3e8] sm:$0xff]
        %v430 = vld [vmem:[%s230 + $0x3f0] sm:$0xff]
        %v431 = vld [vmem:[%s230 + $0x3f8] sm:$0xff]
        %432 = vmatprep.subr.mxu0 %v305
        %433 = vmatpush1.msra.mxu0 %v304
        %434 = vmatprep.subr.mxu0 %v307
        %435 = vmatpush1.msra.mxu0 %v306
        %436 = vmatprep.subr.mxu0 %v309
        %437 = vmatpush1.msra.mxu0 %v308
        %438 = vmatprep.subr.mxu0 %v311
        %439 = vmatpush1.msra.mxu0 %v310
        %440 = vmatprep.subr.mxu0 %v313
        %441 = vmatpush1.msra.mxu0 %v312
        %442 = vmatprep.subr.mxu0 %v315
        %443 = vmatpush1.msra.mxu0 %v314
        %444 = vmatprep.subr.mxu0 %v317
        %445 = vmatpush1.msra.mxu0 %v316
        %446 = vmatprep.subr.mxu0 %v319
        %447 = vmatpush1.msra.mxu0 %v318
        %448 = vmatprep.subr.mxu0 %v321
        %449 = vmatpush1.msra.mxu0 %v320
        %450 = vmatprep.subr.mxu0 %v323
        %451 = vmatpush1.msra.mxu0 %v322
        %452 = vmatprep.subr.mxu0 %v325
        %453 = vmatpush1.msra.mxu0 %v324
        %454 = vmatprep.subr.mxu0 %v327
        %455 = vmatpush1.msra.mxu0 %v326
        %456 = vmatprep.subr.mxu0 %v329
        %457 = vmatpush1.msra.mxu0 %v328
        %458 = vmatprep.subr.mxu0 %v331
        %459 = vmatpush1.msra.mxu0 %v330
        %460 = vmatprep.subr.mxu0 %v333
        %461 = vmatpush1.msra.mxu0 %v332
        %462 = vmatprep.subr.mxu0 %v335
        %463 = vmatpush1.msra.mxu0 %v334
        %464 = vmatprep.subr.mxu0 %v337
        %465 = vmatpush1.msra.mxu0 %v336
        %466 = vmatprep.subr.mxu0 %v339
        %467 = vmatpush1.msra.mxu0 %v338
        %468 = vmatprep.subr.mxu0 %v341
        %469 = vmatpush1.msra.mxu0 %v340
        %470 = vmatprep.subr.mxu0 %v343
        %471 = vmatpush1.msra.mxu0 %v342
        %472 = vmatprep.subr.mxu0 %v345
        %473 = vmatpush1.msra.mxu0 %v344
        %474 = vmatprep.subr.mxu0 %v347
        %475 = vmatpush1.msra.mxu0 %v346
        %476 = vmatprep.subr.mxu0 %v349
        %477 = vmatpush1.msra.mxu0 %v348
        %478 = vmatprep.subr.mxu0 %v351
        %479 = vmatpush1.msra.mxu0 %v350
        %480 = vmatprep.subr.mxu0 %v353
        %481 = vmatpush1.msra.mxu0 %v352
        %482 = vmatprep.subr.mxu0 %v355
        %483 = vmatpush1.msra.mxu0 %v354
        %484 = vmatprep.subr.mxu0 %v357
        %485 = vmatpush1.msra.mxu0 %v356
        %486 = vmatprep.subr.mxu0 %v359
        %487 = vmatpush1.msra.mxu0 %v358
        %488 = vmatprep.subr.mxu0 %v361
        %489 = vmatpush1.msra.mxu0 %v360
        %490 = vmatprep.subr.mxu0 %v363
        %491 = vmatpush1.msra.mxu0 %v362
        %492 = vmatprep.subr.mxu0 %v365
        %493 = vmatpush1.msra.mxu0 %v364
        %494 = vmatprep.subr.mxu0 %v367
        %495 = vmatpush1.msra.mxu0 %v366
        %496 = vmatprep.mubr.f32.mxu0 %v289
        %497 = vmatmul.mubr.f32.gmra.mrb[0].mxu0 %v288
        %v498 = vpop.f32.mrb[0].mxu0
        %v499 = vadd.f32 0.0, %v498
        %v500 = vpop.f32.mrb[0].mxu0
        %v501 = vadd.f32 0.0, %v500
        %502 = vmatprep.mubr.f32.mxu0 %v293
        %503 = vmatmul.mubr.f32.gmra.mrb[0].mxu0 %v292
        %v504 = vpop.f32.mrb[0].mxu0
        %v505 = vadd.f32 0.0, %v504
        %v506 = vpop.f32.mrb[0].mxu0
        %v507 = vadd.f32 0.0, %v506
        %508 = vmatprep.mubr.f32.mxu0 %v297
        %509 = vmatmul.mubr.f32.gmra.mrb[0].mxu0 %v296
        %v510 = vpop.f32.mrb[0].mxu0
        %v511 = vadd.f32 0.0, %v510
        %v512 = vpop.f32.mrb[0].mxu0
        %v513 = vadd.f32 0.0, %v512
        %514 = vmatprep.mubr.f32.mxu0 %v301
        %515 = vmatmul.mubr.f32.gmra.mrb[0].mxu0 %v300
        %v516 = vpop.f32.mrb[0].mxu0
        %v517 = vadd.f32 0.0, %v516
        %v518 = vpop.f32.mrb[0].mxu0
        %v519 = vadd.f32 0.0, %v518
        %520 = vdwg.mxu0
        %521 = vmatprep.subr.mxu0 %v369
        %522 = vmatpush1.msra.mxu0 %v368
        %523 = vmatprep.subr.mxu0 %v371
        %524 = vmatpush1.msra.mxu0 %v370
        %525 = vmatprep.subr.mxu0 %v373
        %526 = vmatpush1.msra.mxu0 %v372
        %527 = vmatprep.subr.mxu0 %v375
        %528 = vmatpush1.msra.mxu0 %v374
        %529 = vmatprep.subr.mxu0 %v377
        %530 = vmatpush1.msra.mxu0 %v376
        %531 = vmatprep.subr.mxu0 %v379
        %532 = vmatpush1.msra.mxu0 %v378
        %533 = vmatprep.subr.mxu0 %v381
        %534 = vmatpush1.msra.mxu0 %v380
        %535 = vmatprep.subr.mxu0 %v383
        %536 = vmatpush1.msra.mxu0 %v382
        %537 = vmatprep.subr.mxu0 %v385
        %538 = vmatpush1.msra.mxu0 %v384
        %539 = vmatprep.subr.mxu0 %v387
        %540 = vmatpush1.msra.mxu0 %v386
        %541 = vmatprep.subr.mxu0 %v389
        %542 = vmatpush1.msra.mxu0 %v388
        %543 = vmatprep.subr.mxu0 %v391
        %544 = vmatpush1.msra.mxu0 %v390
        %545 = vmatprep.subr.mxu0 %v393
        %546 = vmatpush1.msra.mxu0 %v392
        %547 = vmatprep.subr.mxu0 %v395
        %548 = vmatpush1.msra.mxu0 %v394
        %549 = vmatprep.subr.mxu0 %v397
        %550 = vmatpush1.msra.mxu0 %v396
        %551 = vmatprep.subr.mxu0 %v399
        %552 = vmatpush1.msra.mxu0 %v398
        %553 = vmatprep.subr.mxu0 %v401
        %554 = vmatpush1.msra.mxu0 %v400
        %555 = vmatprep.subr.mxu0 %v403
        %556 = vmatpush1.msra.mxu0 %v402
        %557 = vmatprep.subr.mxu0 %v405
        %558 = vmatpush1.msra.mxu0 %v404
        %559 = vmatprep.subr.mxu0 %v407
        %560 = vmatpush1.msra.mxu0 %v406
        %561 = vmatprep.subr.mxu0 %v409
        %562 = vmatpush1.msra.mxu0 %v408
        %563 = vmatprep.subr.mxu0 %v411
        %564 = vmatpush1.msra.mxu0 %v410
        %565 = vmatprep.subr.mxu0 %v413
        %566 = vmatpush1.msra.mxu0 %v412
        %567 = vmatprep.subr.mxu0 %v415
        %568 = vmatpush1.msra.mxu0 %v414
        %569 = vmatprep.subr.mxu0 %v417
        %570 = vmatpush1.msra.mxu0 %v416
        %571 = vmatprep.subr.mxu0 %v419
        %572 = vmatpush1.msra.mxu0 %v418
        %573 = vmatprep.subr.mxu0 %v421
        %574 = vmatpush1.msra.mxu0 %v420
        %575 = vmatprep.subr.mxu0 %v423
        %576 = vmatpush1.msra.mxu0 %v422
        %577 = vmatprep.subr.mxu0 %v425
        %578 = vmatpush1.msra.mxu0 %v424
        %579 = vmatprep.subr.mxu0 %v427
        %580 = vmatpush1.msra.mxu0 %v426
        %581 = vmatprep.subr.mxu0 %v429
        %582 = vmatpush1.msra.mxu0 %v428
        %583 = vmatprep.subr.mxu0 %v431
        %584 = vmatpush1.msra.mxu0 %v430
        %585 = vmatprep.mubr.f32.mxu0 %v291
        %586 = vmatmul.mubr.f32.gmra.mrb[0].mxu0 %v290
        %v587 = vpop.f32.mrb[0].mxu0
        %v588 = vadd.f32 %v499, %v587
        %v589 = vpop.f32.mrb[0].mxu0
        %v590 = vadd.f32 %v501, %v589
        %591 = vmatprep.mubr.f32.mxu0 %v295
        %592 = vmatmul.mubr.f32.gmra.mrb[0].mxu0 %v294
        %v593 = vpop.f32.mrb[0].mxu0
        %v594 = vadd.f32 %v505, %v593
        %v595 = vpop.f32.mrb[0].mxu0
        %v596 = vadd.f32 %v507, %v595
        %597 = vmatprep.mubr.f32.mxu0 %v299
        %598 = vmatmul.mubr.f32.gmra.mrb[0].mxu0 %v298
        %v599 = vpop.f32.mrb[0].mxu0
        %v600 = vadd.f32 %v511, %v599
        %v601 = vpop.f32.mrb[0].mxu0
        %v602 = vadd.f32 %v513, %v601
        %603 = vmatprep.mubr.f32.mxu0 %v303
        %604 = vmatmul.mubr.f32.gmra.mrb[0].mxu0 %v302
        %v605 = vpop.f32.mrb[0].mxu0
        %v606 = vadd.f32 %v517, %v605
        %v607 = vpop.f32.mrb[0].mxu0
        %v608 = vadd.f32 %v519, %v607
        %609 = vdwg.mxu0
        %v610 = vadd.f32 %v280, %v588
        %v611 = vadd.f32 %v281, %v590
        %v612 = vadd.f32 %v282, %v594
        %v613 = vadd.f32 %v283, %v596
        %v614 = vadd.f32 %v284, %v600
        %v615 = vadd.f32 %v285, %v602
        %v616 = vadd.f32 %v286, %v606
        %v617 = vadd.f32 %v287, %v608
        %618 = vst [vmem:[#allocation2] sm:$0xff] %v610
        %619 = vst [vmem:[#allocation2 + $0x8] sm:$0xff] %v611
        %620 = vst [vmem:[#allocation2 + $0x10] sm:$0xff] %v612
        %621 = vst [vmem:[#allocation2 + $0x18] sm:$0xff] %v613
        %622 = vst [vmem:[#allocation2 + $0x20] sm:$0xff] %v614
        %623 = vst [vmem:[#allocation2 + $0x28] sm:$0xff] %v615
        %624 = vst [vmem:[#allocation2 + $0x30] sm:$0xff] %v616
        %625 = vst [vmem:[#allocation2 + $0x38] sm:$0xff] %v617
        // Predicated region
        $region45: #{tpu_custom_call.1} parent=31 // pred_check
          %p626 = pneg %p268
        $region46: #{tpu_custom_call.1} parent=31 // pred_check_branch
          %628 = sbr.rel (%p626) target = $region48
        $region47: #{tpu_custom_call.1} parent=31 // pred_region
          %v629 = vld [vmem:[#allocation2] sm:$0xff]
          %v630 = vld [vmem:[#allocation2 + $0x8] sm:$0xff]
          %v631 = vld [vmem:[#allocation2 + $0x10] sm:$0xff]
          %v632 = vld [vmem:[#allocation2 + $0x18] sm:$0xff]
          %v633 = vld [vmem:[#allocation2 + $0x20] sm:$0xff]
          %v634 = vld [vmem:[#allocation2 + $0x28] sm:$0xff]
          %v635 = vld [vmem:[#allocation2 + $0x30] sm:$0xff]
          %v636 = vld [vmem:[#allocation2 + $0x38] sm:$0xff]
          %v637 = vld [vmem:[%s264] sm:$0x3]
          %v639 = vlaneseq
          %v640 = vshrl.u32 %v639, 7
          %v641 = vsub.s32 0, %v640
          %v642 = vrot.slane %v637, %v641
          %v643 = vlaneseq
          %v644 = vshrl.u32 %v643, 7
          %v645 = vsub.s32 1, %v644
          %v646 = vrot.slane %v637, %v645
          %v649 = vadd.f32 %v629, %v642
          %v650 = vadd.f32 %v630, %v646
          %v651 = vadd.f32 %v631, %v642
          %v652 = vadd.f32 %v632, %v646
          %v653 = vadd.f32 %v633, %v642
          %v654 = vadd.f32 %v634, %v646
          %v655 = vadd.f32 %v635, %v642
          %v656 = vadd.f32 %v636, %v646
          %657 = vst [vmem:[%s256] sm:$0xff] %v649
          %658 = vst [vmem:[%s256 + $0x8] sm:$0xff] %v650
          %659 = vst [vmem:[%s256 + $0x10] sm:$0xff] %v651
          %660 = vst [vmem:[%s256 + $0x18] sm:$0xff] %v652
          %661 = vst [vmem:[%s256 + $0x20] sm:$0xff] %v653
          %662 = vst [vmem:[%s256 + $0x28] sm:$0xff] %v654
          %663 = vst [vmem:[%s256 + $0x30] sm:$0xff] %v655
          %664 = vst [vmem:[%s256 + $0x38] sm:$0xff] %v656
        $region48: #{tpu_custom_call.1} parent=31 // pred_fallthru
          _
        %s665 = sand.u32 %s132, 1
        %s666 = scalar_lea.sflag [#allocation5], %s665
        %s667 = sand.u32 %s132, 1
        %s668 = smul.addr %s667, 64
        %s669 = scalar_lea.vmem [#allocation8], %s668
        // Predicated region
        $region49: #{tpu_custom_call.1} parent=31 // pred_check
          %p670 = pneg %p142
        $region50: #{tpu_custom_call.1} parent=31 // pred_check_branch
          %672 = sbr.rel (%p670) target = $region52
        $region51: #{tpu_custom_call.1} parent=31 // pred_region
          %s673 = smul.u32 4, %s26
          %s674 = smul.u32 2, %s27
          %s676 = ssub.s32 1024, 1024
          %677 = vsyncadd %s666, %s676
          %s678 = smul.addr %s673, 4
          %s679 = sadd.s32 %s674, %s678
          %s680 = smul.addr %s679, 128
          %s681 = scalar_lea.hbm %s3, %s680
          %s682 = sshll.u32 %s669, 4
          %s683 = int_to_ptr.vmem [resolvable:$true] %s682
          %688 = dma.vmem_to_hbm [thread:$0]  %s683, 1024, %s681, %s666, 256, 512, 16
        $region52: #{tpu_custom_call.1} parent=31 // pred_fallthru
          _
      $region32: #{tpu_custom_call.1} parent=5 // pred_fallthru
        _
      %p689 = scmp.le.s32.totalorder 2, %s16
      // Predicated region
      $region53: #{tpu_custom_call.1} parent=5 // pred_check
        %p690 = pneg %p689
      $region54: #{tpu_custom_call.1} parent=5 // pred_check_branch
        %692 = sbr.rel (%p690) target = $region56
      $region55: #{tpu_custom_call.1} parent=5 // pred_region
        %s693 = ssub.s32 %s16, 2
        // Predicated region
        $region57: #{tpu_custom_call.1} parent=55 // pred_check
          %p694 = pneg %p148
        $region58: #{tpu_custom_call.1} parent=55 // pred_check_branch
          %696 = sbr.rel (%p694) target = $region60
        $region59: #{tpu_custom_call.1} parent=55 // pred_region
          %s697 = sand.u32 %s133, 1
          %s698 = scalar_lea.sflag [#allocation5], %s697
          %s699 = sand.u32 %s133, 1
          %s700 = smul.addr %s699, 64
          %s701 = scalar_lea.vmem [#allocation8], %s700
          %702 = dma.done %s698, 1024
        $region60: #{tpu_custom_call.1} parent=55 // pred_fallthru
          _
      $region56: #{tpu_custom_call.1} parent=5 // pred_fallthru
        _
    $region6: #{tpu_custom_call.1} parent=1 // loop_footer
      %s20 = sadd.s32 1, %s16
    $region7: #{tpu_custom_call.1} parent=1 // loop_footer_branch
      %15 = sbr.rel target = $region3
    $region8: #{tpu_custom_call.1} parent=1 // loop_exit
      _
    %703 = vsyncpa [#allocation4], 1
    %s704 = scalar_lea.sflag [#allocation4], 1
    %705 = vsyncpa %s704, 1
    %706 = vsyncpa [#allocation7], 1
    %s707 = scalar_lea.sflag [#allocation7], 1
    %708 = vsyncpa %s707, 1
    %709 = vsyncpa [#allocation5], 1
    %s710 = scalar_lea.sflag [#allocation5], 1
    %711 = vsyncpa %s710, 1

</llo_original>
